<compile_context>
chip_gen: v6e
topology: v6e:2x2x1
jax: 0.10.0
libtpu: 0.0.40
codegen_flags: <defaults>
</compile_context>

<pallas_src>
import jax
import jax.numpy as jnp
from jax.experimental import pallas as pl
from jax.experimental.pallas import tpu as pltpu

IN_FEATURES = 4
HIDDEN = 256


def dqn_forward_kernel(xt_ref, w1_ref, b1_ref, w2_ref, b2_ref, qt_ref, act_ref):
    """Fused DQN forward, batch-in-lanes layout.

    xt_ref : (4, B)    f32  observations, transposed (batch in lanes)
    w1_ref : (256, 4)  f32  fc1.weight (PyTorch (out, in) layout)
    b1_ref : (256, 1)  f32  fc1.bias
    w2_ref : (A, 256)  f32  fc2.weight (PyTorch layout)
    b2_ref : (A, 1)    f32  fc2.bias
    qt_ref : (A, B)    f32  Q-values, transposed (lane-dense in batch)
    act_ref: (1, B)    i32  greedy action per column (argmax over A)
    """
    xt = xt_ref[...]                      # (4, B)
    w1 = w1_ref[...]                      # (256, 4)

    # --- Layer 1: K=4 contraction done on the VPU as broadcast-FMAs. ---
    # h[:, b] = b1 + sum_k w1[:, k] * x[b, k]
    h = b1_ref[...] + w1[:, 0:1] * xt[0:1, :]          # (256, B)
    for k in range(1, IN_FEATURES):                    # static unroll, K=4
        h = h + w1[:, k:k + 1] * xt[k:k + 1, :]
    h = jnp.maximum(h, 0.0)                            # ReLU (VPU)

    # --- Layer 2: MXU matmul, K=256, N=B (batch in lanes). ---
    q = jnp.dot(w2_ref[...], h, preferred_element_type=jnp.float32) + b2_ref[...]
    qt_ref[...] = q.astype(qt_ref.dtype)               # (A, B) lane-dense store

    # --- Fused greedy action: first index of the max (torch.argmax semantics). ---
    n_act = q.shape[0]
    row_ids = jax.lax.broadcasted_iota(jnp.int32, q.shape, 0)   # (A, B)
    q_max = jnp.max(q, axis=0, keepdims=True)                   # (1, B)
    cand = jnp.where(q >= q_max, row_ids, n_act)
    act_ref[...] = jnp.min(cand, axis=0, keepdims=True).astype(jnp.int32)


@jax.jit
def dqn_forward(x, w1, b1, w2, b2):
    """x: (B, 4); w1: (256, 4); b1: (256,); w2: (A, 256); b2: (A,).

    Returns (q, greedy_action): q is (B, A) as in the PyTorch forward(),
    greedy_action is (B,) int32 = argmax(q, axis=1).
    """
    batch = x.shape[0]
    n_actions = w2.shape[0]

    xt = x.T                                   # (4, B): batch -> lanes
    b1c = b1.reshape(HIDDEN, 1)
    b2c = b2.reshape(n_actions, 1)

    # Single program, everything resident in VMEM (total operands ~6.5 KB):
    # no grid, no pipelining machinery, no dimension_semantics.
    # TODO(synk): for large-batch (replay-buffer / target-net) evaluation,
    # tile the batch axis with a BlockSpec grid marked "parallel" (v7x has
    # 2 TCs and only 64 MiB VMEM) and consider bf16 weights on v6e/v7x.
    qt, act = pl.pallas_call(
        dqn_forward_kernel,
        out_shape=(
            jax.ShapeDtypeStruct((n_actions, batch), jnp.float32),
            jax.ShapeDtypeStruct((1, batch), jnp.int32),
        ),
        in_specs=[pl.BlockSpec(memory_space=pltpu.MemorySpace.VMEM)] * 5,
        out_specs=(
            pl.BlockSpec(memory_space=pltpu.MemorySpace.VMEM),
            pl.BlockSpec(memory_space=pltpu.MemorySpace.VMEM),
        ),
    )(xt, w1, b1c, w2, b2c)

    return qt.T, act.reshape(batch)


def init_params(key, n_actions):
    """Deterministic init mimicking nn.Linear defaults, PyTorch weight layout."""
    k1, k2, k3, k4 = jax.random.split(key, 4)
    bound1 = 1.0 / jnp.sqrt(float(IN_FEATURES))
    bound2 = 1.0 / jnp.sqrt(float(HIDDEN))
    w1 = jax.random.uniform(k1, (HIDDEN, IN_FEATURES), jnp.float32, -bound1, bound1)
    b1 = jax.random.uniform(k2, (HIDDEN,), jnp.float32, -bound1, bound1)
    w2 = jax.random.uniform(k3, (n_actions, HIDDEN), jnp.float32, -bound2, bound2)
    b2 = jax.random.uniform(k4, (n_actions,), jnp.float32, -bound2, bound2)
    return w1, b1, w2, b2


if __name__ == "__main__":
    key = jax.random.PRNGKey(0)
    k_x, k_p = jax.random.split(key)

    batch = 8          # small batch of CartPole-like observations
    n_actions = 2      # env_config['n_actions']

    x = jax.random.normal(k_x, (batch, IN_FEATURES), dtype=jnp.float32)
    w1, b1, w2, b2 = init_params(k_p, n_actions)

    q, greedy = dqn_forward(x, w1, b1, w2, b2)
    q = jax.block_until_ready(q)
    greedy = jax.block_until_ready(greedy)

    # Reference check against plain JAX (PyTorch semantics: x @ W.T + b).
    ref = jnp.maximum(x @ w1.T + b1, 0.0) @ w2.T + b2
    assert q.shape == (batch, n_actions)
    assert greedy.shape == (batch,)
    assert jnp.allclose(q, ref, atol=1e-5, rtol=1e-5)
    assert jnp.array_equal(greedy, jnp.argmax(ref, axis=1).astype(jnp.int32))

    # TODO(synk): act()'s epsilon-greedy sampling (torch.rand / randint + the
    # mutable eps annealing state) is host-side control logic, kept outside
    # the kernel; only the greedy argmax is fused.

    print("KERNEL_OK")
</pallas_src>

<mosaic_0001>
module attributes {stable_mosaic.version = 11 : i64} {
  func.func @dqn_forward_kernel(%arg0: memref<4x8xf32, #tpu.memory_space<vmem>>, %arg1: memref<256x4xf32, #tpu.memory_space<vmem>>, %arg2: memref<256x1xf32, #tpu.memory_space<vmem>>, %arg3: memref<2x256xf32, #tpu.memory_space<vmem>>, %arg4: memref<2x1xf32, #tpu.memory_space<vmem>>, %arg5: memref<2x8xf32, #tpu.memory_space<vmem>>, %arg6: memref<1x8xi32, #tpu.memory_space<vmem>>) attributes {dimension_semantics = [], scalar_prefetch = 0 : i64, scratch_operands = 0 : i64, tpu.core_type = #tpu.core_type<tc>} {
    %c0 = arith.constant 0 : index
    %c0_0 = arith.constant 0 : index
    %0 = vector.load %arg0[%c0, %c0_0] : memref<4x8xf32, #tpu.memory_space<vmem>>, vector<4x8xf32>
    %c0_1 = arith.constant 0 : index
    %c0_2 = arith.constant 0 : index
    %1 = vector.load %arg1[%c0_1, %c0_2] : memref<256x4xf32, #tpu.memory_space<vmem>>, vector<256x4xf32>
    %c0_3 = arith.constant 0 : index
    %c0_4 = arith.constant 0 : index
    %2 = vector.load %arg2[%c0_3, %c0_4] : memref<256x1xf32, #tpu.memory_space<vmem>>, vector<256x1xf32>
    %3 = vector.extract_strided_slice %1 {offsets = [0, 0], sizes = [256, 1], strides = [1, 1]} : vector<256x4xf32> to vector<256x1xf32>
    %4 = vector.extract_strided_slice %0 {offsets = [0, 0], sizes = [1, 8], strides = [1, 1]} : vector<4x8xf32> to vector<1x8xf32>
    %5 = vector.broadcast %3 : vector<256x1xf32> to vector<256x8xf32>
    %6 = vector.broadcast %4 : vector<1x8xf32> to vector<256x8xf32>
    %7 = arith.mulf %5, %6 : vector<256x8xf32>
    %8 = vector.broadcast %2 : vector<256x1xf32> to vector<256x8xf32>
    %9 = arith.addf %8, %7 : vector<256x8xf32>
    %10 = vector.extract_strided_slice %1 {offsets = [0, 1], sizes = [256, 1], strides = [1, 1]} : vector<256x4xf32> to vector<256x1xf32>
    %11 = vector.extract_strided_slice %0 {offsets = [1, 0], sizes = [1, 8], strides = [1, 1]} : vector<4x8xf32> to vector<1x8xf32>
    %12 = vector.broadcast %10 : vector<256x1xf32> to vector<256x8xf32>
    %13 = vector.broadcast %11 : vector<1x8xf32> to vector<256x8xf32>
    %14 = arith.mulf %12, %13 : vector<256x8xf32>
    %15 = arith.addf %9, %14 : vector<256x8xf32>
    %16 = vector.extract_strided_slice %1 {offsets = [0, 2], sizes = [256, 1], strides = [1, 1]} : vector<256x4xf32> to vector<256x1xf32>
    %17 = vector.extract_strided_slice %0 {offsets = [2, 0], sizes = [1, 8], strides = [1, 1]} : vector<4x8xf32> to vector<1x8xf32>
    %18 = vector.broadcast %16 : vector<256x1xf32> to vector<256x8xf32>
    %19 = vector.broadcast %17 : vector<1x8xf32> to vector<256x8xf32>
    %20 = arith.mulf %18, %19 : vector<256x8xf32>
    %21 = arith.addf %15, %20 : vector<256x8xf32>
    %22 = vector.extract_strided_slice %1 {offsets = [0, 3], sizes = [256, 1], strides = [1, 1]} : vector<256x4xf32> to vector<256x1xf32>
    %23 = vector.extract_strided_slice %0 {offsets = [3, 0], sizes = [1, 8], strides = [1, 1]} : vector<4x8xf32> to vector<1x8xf32>
    %24 = vector.broadcast %22 : vector<256x1xf32> to vector<256x8xf32>
    %25 = vector.broadcast %23 : vector<1x8xf32> to vector<256x8xf32>
    %26 = arith.mulf %24, %25 : vector<256x8xf32>
    %27 = arith.addf %21, %26 : vector<256x8xf32>
    %cst = arith.constant 0.000000e+00 : f32
    %28 = vector.broadcast %cst : f32 to vector<256x8xf32>
    %29 = arith.maximumf %27, %28 : vector<256x8xf32>
    %c0_5 = arith.constant 0 : index
    %c0_6 = arith.constant 0 : index
    %30 = vector.load %arg3[%c0_5, %c0_6] : memref<2x256xf32, #tpu.memory_space<vmem>>, vector<2x256xf32>
    %cst_7 = arith.constant dense<0.000000e+00> : vector<2x8xf32>
    %31 = tpu.matmul %30, %29, %cst_7 {dimension_numbers = #tpu.dot_dimension_numbers<[1], [0], [0], [1], [0, 0, 1, 1], [], []>} : vector<2x256xf32>, vector<256x8xf32>, vector<2x8xf32> -> vector<2x8xf32>
    %c0_8 = arith.constant 0 : index
    %c0_9 = arith.constant 0 : index
    %32 = vector.load %arg4[%c0_8, %c0_9] : memref<2x1xf32, #tpu.memory_space<vmem>>, vector<2x1xf32>
    %33 = vector.broadcast %32 : vector<2x1xf32> to vector<2x8xf32>
    %34 = arith.addf %31, %33 : vector<2x8xf32>
    %c0_10 = arith.constant 0 : index
    %c0_11 = arith.constant 0 : index
    %35 = vector.load %arg5[%c0_10, %c0_11] : memref<2x8xf32, #tpu.memory_space<vmem>>, vector<2x8xf32>
    tpu.vector_store %arg5[%c0_10, %c0_11], %34 {strides = array<i32>} : memref<2x8xf32, #tpu.memory_space<vmem>>, vector<2x8xf32>,
    %36 = tpu.iota {dimensions = array<i32: 0>} : vector<2x8xi32>
    %cst_12 = arith.constant dense<0xFF800000> : vector<8xf32>
    %37 = vector.multi_reduction <maximumf>, %34, %cst_12 [0] : vector<2x8xf32> to vector<8xf32>
    %38 = vector.shape_cast %37 : vector<8xf32> to vector<1x8xf32>
    %39 = vector.broadcast %38 : vector<1x8xf32> to vector<2x8xf32>
    %40 = arith.cmpf oge, %34, %39 : vector<2x8xf32>
    %c2_i32 = arith.constant 2 : i32
    %41 = vector.broadcast %c2_i32 : i32 to vector<2x8xi32>
    %42 = arith.select %40, %36, %41 : vector<2x8xi1>, vector<2x8xi32>
    %cst_13 = arith.constant dense<2147483647> : vector<8xi32>
    %43 = vector.multi_reduction <minsi>, %42, %cst_13 [0] : vector<2x8xi32> to vector<8xi32>
    %44 = vector.shape_cast %43 : vector<8xi32> to vector<1x8xi32>
    %c0_14 = arith.constant 0 : index
    %c0_15 = arith.constant 0 : index
    %45 = vector.load %arg6[%c0_14, %c0_15] : memref<1x8xi32, #tpu.memory_space<vmem>>, vector<1x8xi32>
    tpu.vector_store %arg6[%c0_14, %c0_15], %44 {strides = array<i32>} : memref<1x8xi32, #tpu.memory_space<vmem>>, vector<1x8xi32>,
    return
  }
}

</mosaic_0001>

<llo_original>
// kernel: dqn_forward.1
$region0: #{dqn_forward.1}
  #allocation0 [shape = 'u32[]', space=smem, size = 0x4, offset = 0x4, fixed_abs, tag = 'smem constant byte address 0x4 - core index']
  #allocation1 [shape = 'u32[144,128]{1,0:T(1,128)}', space=vmem, size = 0x12000, scoped, tag = 'internal scratch']
  %s0 = inlined_call_operand.vmem [shape: f32[4,8], index: 0, kind: input, shape index: {}]
  %s1 = inlined_call_operand.vmem [shape: f32[256,4], index: 1, kind: input, shape index: {}]
  %s2 = inlined_call_operand.vmem [shape: f32[256,1], index: 2, kind: input, shape index: {}]
  %s3 = inlined_call_operand.vmem [shape: f32[2,256], index: 3, kind: input, shape index: {}]
  %s4 = inlined_call_operand.vmem [shape: f32[2,1], index: 4, kind: input, shape index: {}]
  %s5 = inlined_call_operand.hbm [shape: f32[2,8], index: 5, kind: output, shape index: {0}]
  %s6 = inlined_call_operand.hbm [shape: s32[1,8], index: 6, kind: output, shape index: {1}]
  %7 = xla_tuple %s5, %s6
  %s8 = sld [smem:[#allocation0]]
  $region38: #{dqn_forward.1} parent=0
    _
  %s10 = ssub.s32 1, %s8
  %s11 = scalar_select 0, %s10, %s8
  $region1: #{dqn_forward.1} parent=0
    #allocation2 [shape = 'u8[1024]{0}', space=vmem, size = 0x400, scoped, tag = 'output window, operand 0, single buffered']
    #allocation3 [shape = 's32[1]{0}', space=sflag, size = 0x4, scoped, tag = 'scoped memory for dqn_forward.1']
    #allocation4 [shape = 'u8[512]{0}', space=vmem, size = 0x400, scoped, tag = 'output window, operand 1, single buffered']
    #allocation5 [shape = 's32[1]{0}', space=sflag, size = 0x4, scoped, tag = 'scoped memory for dqn_forward.1']
    %12 = vsyncpa [#allocation3], 0
    %13 = vsyncpa [#allocation5], 0
    // Predicated region
    $region2: #{dqn_forward.1} parent=1 // pred_check
      _
    $region3: #{dqn_forward.1} parent=1 // pred_check_branch
      %15 = sbr.rel (0) target = $region5
    $region4: #{dqn_forward.1} parent=1 // pred_region
      _
    $region5: #{dqn_forward.1} parent=1 // pred_fallthru
      _
    // Predicated region
    $region6: #{dqn_forward.1} parent=1 // pred_check
      _
    $region7: #{dqn_forward.1} parent=1 // pred_check_branch
      %17 = sbr.rel (0) target = $region9
    $region8: #{dqn_forward.1} parent=1 // pred_region
      _
    $region9: #{dqn_forward.1} parent=1 // pred_fallthru
      _
    // Predicated region
    $region10: #{dqn_forward.1} parent=1 // pred_check
      _
    $region11: #{dqn_forward.1} parent=1 // pred_check_branch
      %19 = sbr.rel (0) target = $region13
    $region12: #{dqn_forward.1} parent=1 // pred_region
      _
    $region13: #{dqn_forward.1} parent=1 // pred_fallthru
      _
    // Predicated region
    $region14: #{dqn_forward.1} parent=1 // pred_check
      _
    $region15: #{dqn_forward.1} parent=1 // pred_check_branch
      %21 = sbr.rel (0) target = $region17
    $region16: #{dqn_forward.1} parent=1 // pred_region
      _
    $region17: #{dqn_forward.1} parent=1 // pred_fallthru
      _
    // Predicated region
    $region18: #{dqn_forward.1} parent=1 // pred_check
      _
    $region19: #{dqn_forward.1} parent=1 // pred_check_branch
      %23 = sbr.rel (0) target = $region21
    $region20: #{dqn_forward.1} parent=1 // pred_region
      _
    $region21: #{dqn_forward.1} parent=1 // pred_fallthru
      _
    %v24 = vld [vmem:[%s0] sm:$0xf]
    %v25 = vld [vmem:[%s1] sm:$0xff]
    %v26 = vld [vmem:[%s1 + $0x8] sm:$0xff]
    %v27 = vld [vmem:[%s1 + $0x10] sm:$0xff]
    %v28 = vld [vmem:[%s1 + $0x18] sm:$0xff]
    %v29 = vld [vmem:[%s1 + $0x20] sm:$0xff]
    %v30 = vld [vmem:[%s1 + $0x28] sm:$0xff]
    %v31 = vld [vmem:[%s1 + $0x30] sm:$0xff]
    %v32 = vld [vmem:[%s1 + $0x38] sm:$0xff]
    %v33 = vld [vmem:[%s1 + $0x40] sm:$0xff]
    %v34 = vld [vmem:[%s1 + $0x48] sm:$0xff]
    %v35 = vld [vmem:[%s1 + $0x50] sm:$0xff]
    %v36 = vld [vmem:[%s1 + $0x58] sm:$0xff]
    %v37 = vld [vmem:[%s1 + $0x60] sm:$0xff]
    %v38 = vld [vmem:[%s1 + $0x68] sm:$0xff]
    %v39 = vld [vmem:[%s1 + $0x70] sm:$0xff]
    %v40 = vld [vmem:[%s1 + $0x78] sm:$0xff]
    %v41 = vld [vmem:[%s1 + $0x80] sm:$0xff]
    %v42 = vld [vmem:[%s1 + $0x88] sm:$0xff]
    %v43 = vld [vmem:[%s1 + $0x90] sm:$0xff]
    %v44 = vld [vmem:[%s1 + $0x98] sm:$0xff]
    %v45 = vld [vmem:[%s1 + $0xa0] sm:$0xff]
    %v46 = vld [vmem:[%s1 + $0xa8] sm:$0xff]
    %v47 = vld [vmem:[%s1 + $0xb0] sm:$0xff]
    %v48 = vld [vmem:[%s1 + $0xb8] sm:$0xff]
    %v49 = vld [vmem:[%s1 + $0xc0] sm:$0xff]
    %v50 = vld [vmem:[%s1 + $0xc8] sm:$0xff]
    %v51 = vld [vmem:[%s1 + $0xd0] sm:$0xff]
    %v52 = vld [vmem:[%s1 + $0xd8] sm:$0xff]
    %v53 = vld [vmem:[%s1 + $0xe0] sm:$0xff]
    %v54 = vld [vmem:[%s1 + $0xe8] sm:$0xff]
    %v55 = vld [vmem:[%s1 + $0xf0] sm:$0xff]
    %v56 = vld [vmem:[%s1 + $0xf8] sm:$0xff]
    %v57 = vld [vmem:[%s2] sm:$0xff]
    %v58 = vld [vmem:[%s2 + $0x8] sm:$0xff]
    %v59 = vld [vmem:[%s2 + $0x10] sm:$0xff]
    %v60 = vld [vmem:[%s2 + $0x18] sm:$0xff]
    %v61 = vld [vmem:[%s2 + $0x20] sm:$0xff]
    %v62 = vld [vmem:[%s2 + $0x28] sm:$0xff]
    %v63 = vld [vmem:[%s2 + $0x30] sm:$0xff]
    %v64 = vld [vmem:[%s2 + $0x38] sm:$0xff]
    %v65 = vld [vmem:[%s2 + $0x40] sm:$0xff]
    %v66 = vld [vmem:[%s2 + $0x48] sm:$0xff]
    %v67 = vld [vmem:[%s2 + $0x50] sm:$0xff]
    %v68 = vld [vmem:[%s2 + $0x58] sm:$0xff]
    %v69 = vld [vmem:[%s2 + $0x60] sm:$0xff]
    %v70 = vld [vmem:[%s2 + $0x68] sm:$0xff]
    %v71 = vld [vmem:[%s2 + $0x70] sm:$0xff]
    %v72 = vld [vmem:[%s2 + $0x78] sm:$0xff]
    %v73 = vld [vmem:[%s2 + $0x80] sm:$0xff]
    %v74 = vld [vmem:[%s2 + $0x88] sm:$0xff]
    %v75 = vld [vmem:[%s2 + $0x90] sm:$0xff]
    %v76 = vld [vmem:[%s2 + $0x98] sm:$0xff]
    %v77 = vld [vmem:[%s2 + $0xa0] sm:$0xff]
    %v78 = vld [vmem:[%s2 + $0xa8] sm:$0xff]
    %v79 = vld [vmem:[%s2 + $0xb0] sm:$0xff]
    %v80 = vld [vmem:[%s2 + $0xb8] sm:$0xff]
    %v81 = vld [vmem:[%s2 + $0xc0] sm:$0xff]
    %v82 = vld [vmem:[%s2 + $0xc8] sm:$0xff]
    %v83 = vld [vmem:[%s2 + $0xd0] sm:$0xff]
    %v84 = vld [vmem:[%s2 + $0xd8] sm:$0xff]
    %v85 = vld [vmem:[%s2 + $0xe0] sm:$0xff]
    %v86 = vld [vmem:[%s2 + $0xe8] sm:$0xff]
    %v87 = vld [vmem:[%s2 + $0xf0] sm:$0xff]
    %v88 = vld [vmem:[%s2 + $0xf8] sm:$0xff]
    %90 = vset.pattern.permute.xlu0 0
    %91 = vperm.xlu0 %90, %v25
    %v92 = vpop.permute.xlu0 %91
    %95 = vset.pattern.permute.xlu0 0
    %96 = vperm.xlu0 %95, %v26
    %v97 = vpop.permute.xlu0 %96
    %100 = vset.pattern.permute.xlu0 0
    %101 = vperm.xlu0 %100, %v27
    %v102 = vpop.permute.xlu0 %101
    %105 = vset.pattern.permute.xlu0 0
    %106 = vperm.xlu0 %105, %v28
    %v107 = vpop.permute.xlu0 %106
    %110 = vset.pattern.permute.xlu0 0
    %111 = vperm.xlu0 %110, %v29
    %v112 = vpop.permute.xlu0 %111
    %115 = vset.pattern.permute.xlu0 0
    %116 = vperm.xlu0 %115, %v30
    %v117 = vpop.permute.xlu0 %116
    %120 = vset.pattern.permute.xlu0 0
    %121 = vperm.xlu0 %120, %v31
    %v122 = vpop.permute.xlu0 %121
    %125 = vset.pattern.permute.xlu0 0
    %126 = vperm.xlu0 %125, %v32
    %v127 = vpop.permute.xlu0 %126
    %130 = vset.pattern.permute.xlu0 0
    %131 = vperm.xlu0 %130, %v33
    %v132 = vpop.permute.xlu0 %131
    %135 = vset.pattern.permute.xlu0 0
    %136 = vperm.xlu0 %135, %v34
    %v137 = vpop.permute.xlu0 %136
    %140 = vset.pattern.permute.xlu0 0
    %141 = vperm.xlu0 %140, %v35
    %v142 = vpop.permute.xlu0 %141
    %145 = vset.pattern.permute.xlu0 0
    %146 = vperm.xlu0 %145, %v36
    %v147 = vpop.permute.xlu0 %146
    %150 = vset.pattern.permute.xlu0 0
    %151 = vperm.xlu0 %150, %v37
    %v152 = vpop.permute.xlu0 %151
    %155 = vset.pattern.permute.xlu0 0
    %156 = vperm.xlu0 %155, %v38
    %v157 = vpop.permute.xlu0 %156
    %160 = vset.pattern.permute.xlu0 0
    %161 = vperm.xlu0 %160, %v39
    %v162 = vpop.permute.xlu0 %161
    %165 = vset.pattern.permute.xlu0 0
    %166 = vperm.xlu0 %165, %v40
    %v167 = vpop.permute.xlu0 %166
    %170 = vset.pattern.permute.xlu0 0
    %171 = vperm.xlu0 %170, %v41
    %v172 = vpop.permute.xlu0 %171
    %175 = vset.pattern.permute.xlu0 0
    %176 = vperm.xlu0 %175, %v42
    %v177 = vpop.permute.xlu0 %176
    %180 = vset.pattern.permute.xlu0 0
    %181 = vperm.xlu0 %180, %v43
    %v182 = vpop.permute.xlu0 %181
    %185 = vset.pattern.permute.xlu0 0
    %186 = vperm.xlu0 %185, %v44
    %v187 = vpop.permute.xlu0 %186
    %190 = vset.pattern.permute.xlu0 0
    %191 = vperm.xlu0 %190, %v45
    %v192 = vpop.permute.xlu0 %191
    %195 = vset.pattern.permute.xlu0 0
    %196 = vperm.xlu0 %195, %v46
    %v197 = vpop.permute.xlu0 %196
    %200 = vset.pattern.permute.xlu0 0
    %201 = vperm.xlu0 %200, %v47
    %v202 = vpop.permute.xlu0 %201
    %205 = vset.pattern.permute.xlu0 0
    %206 = vperm.xlu0 %205, %v48
    %v207 = vpop.permute.xlu0 %206
    %210 = vset.pattern.permute.xlu0 0
    %211 = vperm.xlu0 %210, %v49
    %v212 = vpop.permute.xlu0 %211
    %215 = vset.pattern.permute.xlu0 0
    %216 = vperm.xlu0 %215, %v50
    %v217 = vpop.permute.xlu0 %216
    %220 = vset.pattern.permute.xlu0 0
    %221 = vperm.xlu0 %220, %v51
    %v222 = vpop.permute.xlu0 %221
    %225 = vset.pattern.permute.xlu0 0
    %226 = vperm.xlu0 %225, %v52
    %v227 = vpop.permute.xlu0 %226
    %230 = vset.pattern.permute.xlu0 0
    %231 = vperm.xlu0 %230, %v53
    %v232 = vpop.permute.xlu0 %231
    %235 = vset.pattern.permute.xlu0 0
    %236 = vperm.xlu0 %235, %v54
    %v237 = vpop.permute.xlu0 %236
    %240 = vset.pattern.permute.xlu0 0
    %241 = vperm.xlu0 %240, %v55
    %v242 = vpop.permute.xlu0 %241
    %245 = vset.pattern.permute.xlu0 0
    %246 = vperm.xlu0 %245, %v56
    %v247 = vpop.permute.xlu0 %246
    %v249 = vlaneseq
    %v250 = vshrl.u32 %v249, 7
    %v251 = vsub.s32 0, %v250
    %v252 = vrot.slane %v24, %v251
    %v253 = vmul.f32 %v92, %v252
    %v254 = vmul.f32 %v97, %v252
    %v255 = vmul.f32 %v102, %v252
    %v256 = vmul.f32 %v107, %v252
    %v257 = vmul.f32 %v112, %v252
    %v258 = vmul.f32 %v117, %v252
    %v259 = vmul.f32 %v122, %v252
    %v260 = vmul.f32 %v127, %v252
    %v261 = vmul.f32 %v132, %v252
    %v262 = vmul.f32 %v137, %v252
    %v263 = vmul.f32 %v142, %v252
    %v264 = vmul.f32 %v147, %v252
    %v265 = vmul.f32 %v152, %v252
    %v266 = vmul.f32 %v157, %v252
    %v267 = vmul.f32 %v162, %v252
    %v268 = vmul.f32 %v167, %v252
    %v269 = vmul.f32 %v172, %v252
    %v270 = vmul.f32 %v177, %v252
    %v271 = vmul.f32 %v182, %v252
    %v272 = vmul.f32 %v187, %v252
    %v273 = vmul.f32 %v192, %v252
    %v274 = vmul.f32 %v197, %v252
    %v275 = vmul.f32 %v202, %v252
    %v276 = vmul.f32 %v207, %v252
    %v277 = vmul.f32 %v212, %v252
    %v278 = vmul.f32 %v217, %v252
    %v279 = vmul.f32 %v222, %v252
    %v280 = vmul.f32 %v227, %v252
    %v281 = vmul.f32 %v232, %v252
    %v282 = vmul.f32 %v237, %v252
    %v283 = vmul.f32 %v242, %v252
    %v284 = vmul.f32 %v247, %v252
    %286 = vset.pattern.permute.xlu0 0
    %287 = vperm.xlu0 %286, %v57
    %v288 = vpop.permute.xlu0 %287
    %291 = vset.pattern.permute.xlu0 0
    %292 = vperm.xlu0 %291, %v58
    %v293 = vpop.permute.xlu0 %292
    %296 = vset.pattern.permute.xlu0 0
    %297 = vperm.xlu0 %296, %v59
    %v298 = vpop.permute.xlu0 %297
    %301 = vset.pattern.permute.xlu0 0
    %302 = vperm.xlu0 %301, %v60
    %v303 = vpop.permute.xlu0 %302
    %306 = vset.pattern.permute.xlu0 0
    %307 = vperm.xlu0 %306, %v61
    %v308 = vpop.permute.xlu0 %307
    %311 = vset.pattern.permute.xlu0 0
    %312 = vperm.xlu0 %311, %v62
    %v313 = vpop.permute.xlu0 %312
    %316 = vset.pattern.permute.xlu0 0
    %317 = vperm.xlu0 %316, %v63
    %v318 = vpop.permute.xlu0 %317
    %321 = vset.pattern.permute.xlu0 0
    %322 = vperm.xlu0 %321, %v64
    %v323 = vpop.permute.xlu0 %322
    %326 = vset.pattern.permute.xlu0 0
    %327 = vperm.xlu0 %326, %v65
    %v328 = vpop.permute.xlu0 %327
    %331 = vset.pattern.permute.xlu0 0
    %332 = vperm.xlu0 %331, %v66
    %v333 = vpop.permute.xlu0 %332
    %336 = vset.pattern.permute.xlu0 0
    %337 = vperm.xlu0 %336, %v67
    %v338 = vpop.permute.xlu0 %337
    %341 = vset.pattern.permute.xlu0 0
    %342 = vperm.xlu0 %341, %v68
    %v343 = vpop.permute.xlu0 %342
    %346 = vset.pattern.permute.xlu0 0
    %347 = vperm.xlu0 %346, %v69
    %v348 = vpop.permute.xlu0 %347
    %351 = vset.pattern.permute.xlu0 0
    %352 = vperm.xlu0 %351, %v70
    %v353 = vpop.permute.xlu0 %352
    %356 = vset.pattern.permute.xlu0 0
    %357 = vperm.xlu0 %356, %v71
    %v358 = vpop.permute.xlu0 %357
    %361 = vset.pattern.permute.xlu0 0
    %362 = vperm.xlu0 %361, %v72
    %v363 = vpop.permute.xlu0 %362
    %366 = vset.pattern.permute.xlu0 0
    %367 = vperm.xlu0 %366, %v73
    %v368 = vpop.permute.xlu0 %367
    %371 = vset.pattern.permute.xlu0 0
    %372 = vperm.xlu0 %371, %v74
    %v373 = vpop.permute.xlu0 %372
    %376 = vset.pattern.permute.xlu0 0
    %377 = vperm.xlu0 %376, %v75
    %v378 = vpop.permute.xlu0 %377
    %381 = vset.pattern.permute.xlu0 0
    %382 = vperm.xlu0 %381, %v76
    %v383 = vpop.permute.xlu0 %382
    %386 = vset.pattern.permute.xlu0 0
    %387 = vperm.xlu0 %386, %v77
    %v388 = vpop.permute.xlu0 %387
    %391 = vset.pattern.permute.xlu0 0
    %392 = vperm.xlu0 %391, %v78
    %v393 = vpop.permute.xlu0 %392
    %396 = vset.pattern.permute.xlu0 0
    %397 = vperm.xlu0 %396, %v79
    %v398 = vpop.permute.xlu0 %397
    %401 = vset.pattern.permute.xlu0 0
    %402 = vperm.xlu0 %401, %v80
    %v403 = vpop.permute.xlu0 %402
    %406 = vset.pattern.permute.xlu0 0
    %407 = vperm.xlu0 %406, %v81
    %v408 = vpop.permute.xlu0 %407
    %411 = vset.pattern.permute.xlu0 0
    %412 = vperm.xlu0 %411, %v82
    %v413 = vpop.permute.xlu0 %412
    %416 = vset.pattern.permute.xlu0 0
    %417 = vperm.xlu0 %416, %v83
    %v418 = vpop.permute.xlu0 %417
    %421 = vset.pattern.permute.xlu0 0
    %422 = vperm.xlu0 %421, %v84
    %v423 = vpop.permute.xlu0 %422
    %426 = vset.pattern.permute.xlu0 0
    %427 = vperm.xlu0 %426, %v85
    %v428 = vpop.permute.xlu0 %427
    %431 = vset.pattern.permute.xlu0 0
    %432 = vperm.xlu0 %431, %v86
    %v433 = vpop.permute.xlu0 %432
    %436 = vset.pattern.permute.xlu0 0
    %437 = vperm.xlu0 %436, %v87
    %v438 = vpop.permute.xlu0 %437
    %441 = vset.pattern.permute.xlu0 0
    %442 = vperm.xlu0 %441, %v88
    %v443 = vpop.permute.xlu0 %442
    %v445 = vadd.f32 %v288, %v253
    %v446 = vadd.f32 %v293, %v254
    %v447 = vadd.f32 %v298, %v255
    %v448 = vadd.f32 %v303, %v256
    %v449 = vadd.f32 %v308, %v257
    %v450 = vadd.f32 %v313, %v258
    %v451 = vadd.f32 %v318, %v259
    %v452 = vadd.f32 %v323, %v260
    %v453 = vadd.f32 %v328, %v261
    %v454 = vadd.f32 %v333, %v262
    %v455 = vadd.f32 %v338, %v263
    %v456 = vadd.f32 %v343, %v264
    %v457 = vadd.f32 %v348, %v265
    %v458 = vadd.f32 %v353, %v266
    %v459 = vadd.f32 %v358, %v267
    %v460 = vadd.f32 %v363, %v268
    %v461 = vadd.f32 %v368, %v269
    %v462 = vadd.f32 %v373, %v270
    %v463 = vadd.f32 %v378, %v271
    %v464 = vadd.f32 %v383, %v272
    %v465 = vadd.f32 %v388, %v273
    %v466 = vadd.f32 %v393, %v274
    %v467 = vadd.f32 %v398, %v275
    %v468 = vadd.f32 %v403, %v276
    %v469 = vadd.f32 %v408, %v277
    %v470 = vadd.f32 %v413, %v278
    %v471 = vadd.f32 %v418, %v279
    %v472 = vadd.f32 %v423, %v280
    %v473 = vadd.f32 %v428, %v281
    %v474 = vadd.f32 %v433, %v282
    %v475 = vadd.f32 %v438, %v283
    %v476 = vadd.f32 %v443, %v284
    %477 = vset.pattern.permute.xlu0 1
    %478 = vperm.xlu0 %477, %v25
    %v479 = vpop.permute.xlu0 %478
    %481 = vset.pattern.permute.xlu0 1
    %482 = vperm.xlu0 %481, %v26
    %v483 = vpop.permute.xlu0 %482
    %485 = vset.pattern.permute.xlu0 1
    %486 = vperm.xlu0 %485, %v27
    %v487 = vpop.permute.xlu0 %486
    %489 = vset.pattern.permute.xlu0 1
    %490 = vperm.xlu0 %489, %v28
    %v491 = vpop.permute.xlu0 %490
    %493 = vset.pattern.permute.xlu0 1
    %494 = vperm.xlu0 %493, %v29
    %v495 = vpop.permute.xlu0 %494
    %497 = vset.pattern.permute.xlu0 1
    %498 = vperm.xlu0 %497, %v30
    %v499 = vpop.permute.xlu0 %498
    %501 = vset.pattern.permute.xlu0 1
    %502 = vperm.xlu0 %501, %v31
    %v503 = vpop.permute.xlu0 %502
    %505 = vset.pattern.permute.xlu0 1
    %506 = vperm.xlu0 %505, %v32
    %v507 = vpop.permute.xlu0 %506
    %509 = vset.pattern.permute.xlu0 1
    %510 = vperm.xlu0 %509, %v33
    %v511 = vpop.permute.xlu0 %510
    %513 = vset.pattern.permute.xlu0 1
    %514 = vperm.xlu0 %513, %v34
    %v515 = vpop.permute.xlu0 %514
    %517 = vset.pattern.permute.xlu0 1
    %518 = vperm.xlu0 %517, %v35
    %v519 = vpop.permute.xlu0 %518
    %521 = vset.pattern.permute.xlu0 1
    %522 = vperm.xlu0 %521, %v36
    %v523 = vpop.permute.xlu0 %522
    %525 = vset.pattern.permute.xlu0 1
    %526 = vperm.xlu0 %525, %v37
    %v527 = vpop.permute.xlu0 %526
    %529 = vset.pattern.permute.xlu0 1
    %530 = vperm.xlu0 %529, %v38
    %v531 = vpop.permute.xlu0 %530
    %533 = vset.pattern.permute.xlu0 1
    %534 = vperm.xlu0 %533, %v39
    %v535 = vpop.permute.xlu0 %534
    %537 = vset.pattern.permute.xlu0 1
    %538 = vperm.xlu0 %537, %v40
    %v539 = vpop.permute.xlu0 %538
    %541 = vset.pattern.permute.xlu0 1
    %542 = vperm.xlu0 %541, %v41
    %v543 = vpop.permute.xlu0 %542
    %545 = vset.pattern.permute.xlu0 1
    %546 = vperm.xlu0 %545, %v42
    %v547 = vpop.permute.xlu0 %546
    %549 = vset.pattern.permute.xlu0 1
    %550 = vperm.xlu0 %549, %v43
    %v551 = vpop.permute.xlu0 %550
    %553 = vset.pattern.permute.xlu0 1
    %554 = vperm.xlu0 %553, %v44
    %v555 = vpop.permute.xlu0 %554
    %557 = vset.pattern.permute.xlu0 1
    %558 = vperm.xlu0 %557, %v45
    %v559 = vpop.permute.xlu0 %558
    %561 = vset.pattern.permute.xlu0 1
    %562 = vperm.xlu0 %561, %v46
    %v563 = vpop.permute.xlu0 %562
    %565 = vset.pattern.permute.xlu0 1
    %566 = vperm.xlu0 %565, %v47
    %v567 = vpop.permute.xlu0 %566
    %569 = vset.pattern.permute.xlu0 1
    %570 = vperm.xlu0 %569, %v48
    %v571 = vpop.permute.xlu0 %570
    %573 = vset.pattern.permute.xlu0 1
    %574 = vperm.xlu0 %573, %v49
    %v575 = vpop.permute.xlu0 %574
    %577 = vset.pattern.permute.xlu0 1
    %578 = vperm.xlu0 %577, %v50
    %v579 = vpop.permute.xlu0 %578
    %581 = vset.pattern.permute.xlu0 1
    %582 = vperm.xlu0 %581, %v51
    %v583 = vpop.permute.xlu0 %582
    %585 = vset.pattern.permute.xlu0 1
    %586 = vperm.xlu0 %585, %v52
    %v587 = vpop.permute.xlu0 %586
    %589 = vset.pattern.permute.xlu0 1
    %590 = vperm.xlu0 %589, %v53
    %v591 = vpop.permute.xlu0 %590
    %593 = vset.pattern.permute.xlu0 1
    %594 = vperm.xlu0 %593, %v54
    %v595 = vpop.permute.xlu0 %594
    %597 = vset.pattern.permute.xlu0 1
    %598 = vperm.xlu0 %597, %v55
    %v599 = vpop.permute.xlu0 %598
    %601 = vset.pattern.permute.xlu0 1
    %602 = vperm.xlu0 %601, %v56
    %v603 = vpop.permute.xlu0 %602
    %v605 = vlaneseq
    %v606 = vshrl.u32 %v605, 7
    %v607 = vsub.s32 1, %v606
    %v608 = vrot.slane %v24, %v607
    %v609 = vmul.f32 %v479, %v608
    %v610 = vmul.f32 %v483, %v608
    %v611 = vmul.f32 %v487, %v608
    %v612 = vmul.f32 %v491, %v608
    %v613 = vmul.f32 %v495, %v608
    %v614 = vmul.f32 %v499, %v608
    %v615 = vmul.f32 %v503, %v608
    %v616 = vmul.f32 %v507, %v608
    %v617 = vmul.f32 %v511, %v608
    %v618 = vmul.f32 %v515, %v608
    %v619 = vmul.f32 %v519, %v608
    %v620 = vmul.f32 %v523, %v608
    %v621 = vmul.f32 %v527, %v608
    %v622 = vmul.f32 %v531, %v608
    %v623 = vmul.f32 %v535, %v608
    %v624 = vmul.f32 %v539, %v608
    %v625 = vmul.f32 %v543, %v608
    %v626 = vmul.f32 %v547, %v608
    %v627 = vmul.f32 %v551, %v608
    %v628 = vmul.f32 %v555, %v608
    %v629 = vmul.f32 %v559, %v608
    %v630 = vmul.f32 %v563, %v608
    %v631 = vmul.f32 %v567, %v608
    %v632 = vmul.f32 %v571, %v608
    %v633 = vmul.f32 %v575, %v608
    %v634 = vmul.f32 %v579, %v608
    %v635 = vmul.f32 %v583, %v608
    %v636 = vmul.f32 %v587, %v608
    %v637 = vmul.f32 %v591, %v608
    %v638 = vmul.f32 %v595, %v608
    %v639 = vmul.f32 %v599, %v608
    %v640 = vmul.f32 %v603, %v608
    %v641 = vadd.f32 %v445, %v609
    %v642 = vadd.f32 %v446, %v610
    %v643 = vadd.f32 %v447, %v611
    %v644 = vadd.f32 %v448, %v612
    %v645 = vadd.f32 %v449, %v613
    %v646 = vadd.f32 %v450, %v614
    %v647 = vadd.f32 %v451, %v615
    %v648 = vadd.f32 %v452, %v616
    %v649 = vadd.f32 %v453, %v617
    %v650 = vadd.f32 %v454, %v618
    %v651 = vadd.f32 %v455, %v619
    %v652 = vadd.f32 %v456, %v620
    %v653 = vadd.f32 %v457, %v621
    %v654 = vadd.f32 %v458, %v622
    %v655 = vadd.f32 %v459, %v623
    %v656 = vadd.f32 %v460, %v624
    %v657 = vadd.f32 %v461, %v625
    %v658 = vadd.f32 %v462, %v626
    %v659 = vadd.f32 %v463, %v627
    %v660 = vadd.f32 %v464, %v628
    %v661 = vadd.f32 %v465, %v629
    %v662 = vadd.f32 %v466, %v630
    %v663 = vadd.f32 %v467, %v631
    %v664 = vadd.f32 %v468, %v632
    %v665 = vadd.f32 %v469, %v633
    %v666 = vadd.f32 %v470, %v634
    %v667 = vadd.f32 %v471, %v635
    %v668 = vadd.f32 %v472, %v636
    %v669 = vadd.f32 %v473, %v637
    %v670 = vadd.f32 %v474, %v638
    %v671 = vadd.f32 %v475, %v639
    %v672 = vadd.f32 %v476, %v640
    %673 = vset.pattern.permute.xlu0 2
    %674 = vperm.xlu0 %673, %v25
    %v675 = vpop.permute.xlu0 %674
    %677 = vset.pattern.permute.xlu0 2
    %678 = vperm.xlu0 %677, %v26
    %v679 = vpop.permute.xlu0 %678
    %681 = vset.pattern.permute.xlu0 2
    %682 = vperm.xlu0 %681, %v27
    %v683 = vpop.permute.xlu0 %682
    %685 = vset.pattern.permute.xlu0 2
    %686 = vperm.xlu0 %685, %v28
    %v687 = vpop.permute.xlu0 %686
    %689 = vset.pattern.permute.xlu0 2
    %690 = vperm.xlu0 %689, %v29
    %v691 = vpop.permute.xlu0 %690
    %693 = vset.pattern.permute.xlu0 2
    %694 = vperm.xlu0 %693, %v30
    %v695 = vpop.permute.xlu0 %694
    %697 = vset.pattern.permute.xlu0 2
    %698 = vperm.xlu0 %697, %v31
    %v699 = vpop.permute.xlu0 %698
    %701 = vset.pattern.permute.xlu0 2
    %702 = vperm.xlu0 %701, %v32
    %v703 = vpop.permute.xlu0 %702
    %705 = vset.pattern.permute.xlu0 2
    %706 = vperm.xlu0 %705, %v33
    %v707 = vpop.permute.xlu0 %706
    %709 = vset.pattern.permute.xlu0 2
    %710 = vperm.xlu0 %709, %v34
    %v711 = vpop.permute.xlu0 %710
    %713 = vset.pattern.permute.xlu0 2
    %714 = vperm.xlu0 %713, %v35
    %v715 = vpop.permute.xlu0 %714
    %717 = vset.pattern.permute.xlu0 2
    %718 = vperm.xlu0 %717, %v36
    %v719 = vpop.permute.xlu0 %718
    %721 = vset.pattern.permute.xlu0 2
    %722 = vperm.xlu0 %721, %v37
    %v723 = vpop.permute.xlu0 %722
    %725 = vset.pattern.permute.xlu0 2
    %726 = vperm.xlu0 %725, %v38
    %v727 = vpop.permute.xlu0 %726
    %729 = vset.pattern.permute.xlu0 2
    %730 = vperm.xlu0 %729, %v39
    %v731 = vpop.permute.xlu0 %730
    %733 = vset.pattern.permute.xlu0 2
    %734 = vperm.xlu0 %733, %v40
    %v735 = vpop.permute.xlu0 %734
    %737 = vset.pattern.permute.xlu0 2
    %738 = vperm.xlu0 %737, %v41
    %v739 = vpop.permute.xlu0 %738
    %741 = vset.pattern.permute.xlu0 2
    %742 = vperm.xlu0 %741, %v42
    %v743 = vpop.permute.xlu0 %742
    %745 = vset.pattern.permute.xlu0 2
    %746 = vperm.xlu0 %745, %v43
    %v747 = vpop.permute.xlu0 %746
    %749 = vset.pattern.permute.xlu0 2
    %750 = vperm.xlu0 %749, %v44
    %v751 = vpop.permute.xlu0 %750
    %753 = vset.pattern.permute.xlu0 2
    %754 = vperm.xlu0 %753, %v45
    %v755 = vpop.permute.xlu0 %754
    %757 = vset.pattern.permute.xlu0 2
    %758 = vperm.xlu0 %757, %v46
    %v759 = vpop.permute.xlu0 %758
    %761 = vset.pattern.permute.xlu0 2
    %762 = vperm.xlu0 %761, %v47
    %v763 = vpop.permute.xlu0 %762
    %765 = vset.pattern.permute.xlu0 2
    %766 = vperm.xlu0 %765, %v48
    %v767 = vpop.permute.xlu0 %766
    %769 = vset.pattern.permute.xlu0 2
    %770 = vperm.xlu0 %769, %v49
    %v771 = vpop.permute.xlu0 %770
    %773 = vset.pattern.permute.xlu0 2
    %774 = vperm.xlu0 %773, %v50
    %v775 = vpop.permute.xlu0 %774
    %777 = vset.pattern.permute.xlu0 2
    %778 = vperm.xlu0 %777, %v51
    %v779 = vpop.permute.xlu0 %778
    %781 = vset.pattern.permute.xlu0 2
    %782 = vperm.xlu0 %781, %v52
    %v783 = vpop.permute.xlu0 %782
    %785 = vset.pattern.permute.xlu0 2
    %786 = vperm.xlu0 %785, %v53
    %v787 = vpop.permute.xlu0 %786
    %789 = vset.pattern.permute.xlu0 2
    %790 = vperm.xlu0 %789, %v54
    %v791 = vpop.permute.xlu0 %790
    %793 = vset.pattern.permute.xlu0 2
    %794 = vperm.xlu0 %793, %v55
    %v795 = vpop.permute.xlu0 %794
    %797 = vset.pattern.permute.xlu0 2
    %798 = vperm.xlu0 %797, %v56
    %v799 = vpop.permute.xlu0 %798
    %v801 = vlaneseq
    %v802 = vshrl.u32 %v801, 7
    %v803 = vsub.s32 2, %v802
    %v804 = vrot.slane %v24, %v803
    %v805 = vmul.f32 %v675, %v804
    %v806 = vmul.f32 %v679, %v804
    %v807 = vmul.f32 %v683, %v804
    %v808 = vmul.f32 %v687, %v804
    %v809 = vmul.f32 %v691, %v804
    %v810 = vmul.f32 %v695, %v804
    %v811 = vmul.f32 %v699, %v804
    %v812 = vmul.f32 %v703, %v804
    %v813 = vmul.f32 %v707, %v804
    %v814 = vmul.f32 %v711, %v804
    %v815 = vmul.f32 %v715, %v804
    %v816 = vmul.f32 %v719, %v804
    %v817 = vmul.f32 %v723, %v804
    %v818 = vmul.f32 %v727, %v804
    %v819 = vmul.f32 %v731, %v804
    %v820 = vmul.f32 %v735, %v804
    %v821 = vmul.f32 %v739, %v804
    %v822 = vmul.f32 %v743, %v804
    %v823 = vmul.f32 %v747, %v804
    %v824 = vmul.f32 %v751, %v804
    %v825 = vmul.f32 %v755, %v804
    %v826 = vmul.f32 %v759, %v804
    %v827 = vmul.f32 %v763, %v804
    %v828 = vmul.f32 %v767, %v804
    %v829 = vmul.f32 %v771, %v804
    %v830 = vmul.f32 %v775, %v804
    %v831 = vmul.f32 %v779, %v804
    %v832 = vmul.f32 %v783, %v804
    %v833 = vmul.f32 %v787, %v804
    %v834 = vmul.f32 %v791, %v804
    %v835 = vmul.f32 %v795, %v804
    %v836 = vmul.f32 %v799, %v804
    %v837 = vadd.f32 %v641, %v805
    %v838 = vadd.f32 %v642, %v806
    %v839 = vadd.f32 %v643, %v807
    %v840 = vadd.f32 %v644, %v808
    %v841 = vadd.f32 %v645, %v809
    %v842 = vadd.f32 %v646, %v810
    %v843 = vadd.f32 %v647, %v811
    %v844 = vadd.f32 %v648, %v812
    %v845 = vadd.f32 %v649, %v813
    %v846 = vadd.f32 %v650, %v814
    %v847 = vadd.f32 %v651, %v815
    %v848 = vadd.f32 %v652, %v816
    %v849 = vadd.f32 %v653, %v817
    %v850 = vadd.f32 %v654, %v818
    %v851 = vadd.f32 %v655, %v819
    %v852 = vadd.f32 %v656, %v820
    %v853 = vadd.f32 %v657, %v821
    %v854 = vadd.f32 %v658, %v822
    %v855 = vadd.f32 %v659, %v823
    %v856 = vadd.f32 %v660, %v824
    %v857 = vadd.f32 %v661, %v825
    %v858 = vadd.f32 %v662, %v826
    %v859 = vadd.f32 %v663, %v827
    %v860 = vadd.f32 %v664, %v828
    %v861 = vadd.f32 %v665, %v829
    %v862 = vadd.f32 %v666, %v830
    %v863 = vadd.f32 %v667, %v831
    %v864 = vadd.f32 %v668, %v832
    %v865 = vadd.f32 %v669, %v833
    %v866 = vadd.f32 %v670, %v834
    %v867 = vadd.f32 %v671, %v835
    %v868 = vadd.f32 %v672, %v836
    %869 = vset.pattern.permute.xlu0 3
    %870 = vperm.xlu0 %869, %v25
    %v871 = vpop.permute.xlu0 %870
    %873 = vset.pattern.permute.xlu0 3
    %874 = vperm.xlu0 %873, %v26
    %v875 = vpop.permute.xlu0 %874
    %877 = vset.pattern.permute.xlu0 3
    %878 = vperm.xlu0 %877, %v27
    %v879 = vpop.permute.xlu0 %878
    %881 = vset.pattern.permute.xlu0 3
    %882 = vperm.xlu0 %881, %v28
    %v883 = vpop.permute.xlu0 %882
    %885 = vset.pattern.permute.xlu0 3
    %886 = vperm.xlu0 %885, %v29
    %v887 = vpop.permute.xlu0 %886
    %889 = vset.pattern.permute.xlu0 3
    %890 = vperm.xlu0 %889, %v30
    %v891 = vpop.permute.xlu0 %890
    %893 = vset.pattern.permute.xlu0 3
    %894 = vperm.xlu0 %893, %v31
    %v895 = vpop.permute.xlu0 %894
    %897 = vset.pattern.permute.xlu0 3
    %898 = vperm.xlu0 %897, %v32
    %v899 = vpop.permute.xlu0 %898
    %901 = vset.pattern.permute.xlu0 3
    %902 = vperm.xlu0 %901, %v33
    %v903 = vpop.permute.xlu0 %902
    %905 = vset.pattern.permute.xlu0 3
    %906 = vperm.xlu0 %905, %v34
    %v907 = vpop.permute.xlu0 %906
    %909 = vset.pattern.permute.xlu0 3
    %910 = vperm.xlu0 %909, %v35
    %v911 = vpop.permute.xlu0 %910
    %913 = vset.pattern.permute.xlu0 3
    %914 = vperm.xlu0 %913, %v36
    %v915 = vpop.permute.xlu0 %914
    %917 = vset.pattern.permute.xlu0 3
    %918 = vperm.xlu0 %917, %v37
    %v919 = vpop.permute.xlu0 %918
    %921 = vset.pattern.permute.xlu0 3
    %922 = vperm.xlu0 %921, %v38
    %v923 = vpop.permute.xlu0 %922
    %925 = vset.pattern.permute.xlu0 3
    %926 = vperm.xlu0 %925, %v39
    %v927 = vpop.permute.xlu0 %926
    %929 = vset.pattern.permute.xlu0 3
    %930 = vperm.xlu0 %929, %v40
    %v931 = vpop.permute.xlu0 %930
    %933 = vset.pattern.permute.xlu0 3
    %934 = vperm.xlu0 %933, %v41
    %v935 = vpop.permute.xlu0 %934
    %937 = vset.pattern.permute.xlu0 3
    %938 = vperm.xlu0 %937, %v42
    %v939 = vpop.permute.xlu0 %938
    %941 = vset.pattern.permute.xlu0 3
    %942 = vperm.xlu0 %941, %v43
    %v943 = vpop.permute.xlu0 %942
    %945 = vset.pattern.permute.xlu0 3
    %946 = vperm.xlu0 %945, %v44
    %v947 = vpop.permute.xlu0 %946
    %949 = vset.pattern.permute.xlu0 3
    %950 = vperm.xlu0 %949, %v45
    %v951 = vpop.permute.xlu0 %950
    %953 = vset.pattern.permute.xlu0 3
    %954 = vperm.xlu0 %953, %v46
    %v955 = vpop.permute.xlu0 %954
    %957 = vset.pattern.permute.xlu0 3
    %958 = vperm.xlu0 %957, %v47
    %v959 = vpop.permute.xlu0 %958
    %961 = vset.pattern.permute.xlu0 3
    %962 = vperm.xlu0 %961, %v48
    %v963 = vpop.permute.xlu0 %962
    %965 = vset.pattern.permute.xlu0 3
    %966 = vperm.xlu0 %965, %v49
    %v967 = vpop.permute.xlu0 %966
    %969 = vset.pattern.permute.xlu0 3
    %970 = vperm.xlu0 %969, %v50
    %v971 = vpop.permute.xlu0 %970
    %973 = vset.pattern.permute.xlu0 3
    %974 = vperm.xlu0 %973, %v51
    %v975 = vpop.permute.xlu0 %974
    %977 = vset.pattern.permute.xlu0 3
    %978 = vperm.xlu0 %977, %v52
    %v979 = vpop.permute.xlu0 %978
    %981 = vset.pattern.permute.xlu0 3
    %982 = vperm.xlu0 %981, %v53
    %v983 = vpop.permute.xlu0 %982
    %985 = vset.pattern.permute.xlu0 3
    %986 = vperm.xlu0 %985, %v54
    %v987 = vpop.permute.xlu0 %986
    %989 = vset.pattern.permute.xlu0 3
    %990 = vperm.xlu0 %989, %v55
    %v991 = vpop.permute.xlu0 %990
    %993 = vset.pattern.permute.xlu0 3
    %994 = vperm.xlu0 %993, %v56
    %v995 = vpop.permute.xlu0 %994
    %v997 = vlaneseq
    %v998 = vshrl.u32 %v997, 7
    %v999 = vsub.s32 3, %v998
    %v1000 = vrot.slane %v24, %v999
    %v1001 = vmul.f32 %v871, %v1000
    %v1002 = vmul.f32 %v875, %v1000
    %v1003 = vmul.f32 %v879, %v1000
    %v1004 = vmul.f32 %v883, %v1000
    %v1005 = vmul.f32 %v887, %v1000
    %v1006 = vmul.f32 %v891, %v1000
    %v1007 = vmul.f32 %v895, %v1000
    %v1008 = vmul.f32 %v899, %v1000
    %v1009 = vmul.f32 %v903, %v1000
    %v1010 = vmul.f32 %v907, %v1000
    %v1011 = vmul.f32 %v911, %v1000
    %v1012 = vmul.f32 %v915, %v1000
    %v1013 = vmul.f32 %v919, %v1000
    %v1014 = vmul.f32 %v923, %v1000
    %v1015 = vmul.f32 %v927, %v1000
    %v1016 = vmul.f32 %v931, %v1000
    %v1017 = vmul.f32 %v935, %v1000
    %v1018 = vmul.f32 %v939, %v1000
    %v1019 = vmul.f32 %v943, %v1000
    %v1020 = vmul.f32 %v947, %v1000
    %v1021 = vmul.f32 %v951, %v1000
    %v1022 = vmul.f32 %v955, %v1000
    %v1023 = vmul.f32 %v959, %v1000
    %v1024 = vmul.f32 %v963, %v1000
    %v1025 = vmul.f32 %v967, %v1000
    %v1026 = vmul.f32 %v971, %v1000
    %v1027 = vmul.f32 %v975, %v1000
    %v1028 = vmul.f32 %v979, %v1000
    %v1029 = vmul.f32 %v983, %v1000
    %v1030 = vmul.f32 %v987, %v1000
    %v1031 = vmul.f32 %v991, %v1000
    %v1032 = vmul.f32 %v995, %v1000
    %v1033 = vadd.f32 %v837, %v1001
    %v1034 = vadd.f32 %v838, %v1002
    %v1035 = vadd.f32 %v839, %v1003
    %v1036 = vadd.f32 %v840, %v1004
    %v1037 = vadd.f32 %v841, %v1005
    %v1038 = vadd.f32 %v842, %v1006
    %v1039 = vadd.f32 %v843, %v1007
    %v1040 = vadd.f32 %v844, %v1008
    %v1041 = vadd.f32 %v845, %v1009
    %v1042 = vadd.f32 %v846, %v1010
    %v1043 = vadd.f32 %v847, %v1011
    %v1044 = vadd.f32 %v848, %v1012
    %v1045 = vadd.f32 %v849, %v1013
    %v1046 = vadd.f32 %v850, %v1014
    %v1047 = vadd.f32 %v851, %v1015
    %v1048 = vadd.f32 %v852, %v1016
    %v1049 = vadd.f32 %v853, %v1017
    %v1050 = vadd.f32 %v854, %v1018
    %v1051 = vadd.f32 %v855, %v1019
    %v1052 = vadd.f32 %v856, %v1020
    %v1053 = vadd.f32 %v857, %v1021
    %v1054 = vadd.f32 %v858, %v1022
    %v1055 = vadd.f32 %v859, %v1023
    %v1056 = vadd.f32 %v860, %v1024
    %v1057 = vadd.f32 %v861, %v1025
    %v1058 = vadd.f32 %v862, %v1026
    %v1059 = vadd.f32 %v863, %v1027
    %v1060 = vadd.f32 %v864, %v1028
    %v1061 = vadd.f32 %v865, %v1029
    %v1062 = vadd.f32 %v866, %v1030
    %v1063 = vadd.f32 %v867, %v1031
    %v1064 = vadd.f32 %v868, %v1032
    %v1065 = vmax.f32 %v1033, 0.0
    %v1066 = vmax.f32 %v1034, 0.0
    %v1067 = vmax.f32 %v1035, 0.0
    %v1068 = vmax.f32 %v1036, 0.0
    %v1069 = vmax.f32 %v1037, 0.0
    %v1070 = vmax.f32 %v1038, 0.0
    %v1071 = vmax.f32 %v1039, 0.0
    %v1072 = vmax.f32 %v1040, 0.0
    %v1073 = vmax.f32 %v1041, 0.0
    %v1074 = vmax.f32 %v1042, 0.0
    %v1075 = vmax.f32 %v1043, 0.0
    %v1076 = vmax.f32 %v1044, 0.0
    %v1077 = vmax.f32 %v1045, 0.0
    %v1078 = vmax.f32 %v1046, 0.0
    %v1079 = vmax.f32 %v1047, 0.0
    %v1080 = vmax.f32 %v1048, 0.0
    %v1081 = vmax.f32 %v1049, 0.0
    %v1082 = vmax.f32 %v1050, 0.0
    %v1083 = vmax.f32 %v1051, 0.0
    %v1084 = vmax.f32 %v1052, 0.0
    %v1085 = vmax.f32 %v1053, 0.0
    %v1086 = vmax.f32 %v1054, 0.0
    %v1087 = vmax.f32 %v1055, 0.0
    %v1088 = vmax.f32 %v1056, 0.0
    %v1089 = vmax.f32 %v1057, 0.0
    %v1090 = vmax.f32 %v1058, 0.0
    %v1091 = vmax.f32 %v1059, 0.0
    %v1092 = vmax.f32 %v1060, 0.0
    %v1093 = vmax.f32 %v1061, 0.0
    %v1094 = vmax.f32 %v1062, 0.0
    %v1095 = vmax.f32 %v1063, 0.0
    %v1096 = vmax.f32 %v1064, 0.0
    %v1097 = vld [vmem:[%s3] sm:$0xf]
    %v1098 = vld [vmem:[%s4] sm:$0x3]
    %1100 = vset.pattern.permute.xlu0 0
    %1101 = vperm.xlu0 %1100, %v1098
    %v1102 = vpop.permute.xlu0 %1101
    %v1106 = vunpack.c.l.s4 1983009808
    %v1107 = vunpack.c.0.s8 %v1106
    %v1108 = vlaneseq
    %v1109 = vshrl.u32 %v1108, 7
    %v1110 = vsub.s32 %v1107, %v1109
    %v1111 = vrot.slane %v1097, %v1110
    %v1112 = vcombine.high %v1111, %v1111
    %1115 = vmatprep.subr.mxu0 0.0
    %1116 = vmatpush1.msra.mxu0 %v1080
    %1117 = vmatprep.subr.mxu0 0.0
    %1118 = vmatpush1.msra.mxu0 %v1079
    %1119 = vmatprep.subr.mxu0 0.0
    %1120 = vmatpush1.msra.mxu0 %v1078
    %1121 = vmatprep.subr.mxu0 0.0
    %1122 = vmatpush1.msra.mxu0 %v1077
    %1123 = vmatprep.subr.mxu0 0.0
    %1124 = vmatpush1.msra.mxu0 %v1076
    %1125 = vmatprep.subr.mxu0 0.0
    %1126 = vmatpush1.msra.mxu0 %v1075
    %1127 = vmatprep.subr.mxu0 0.0
    %1128 = vmatpush1.msra.mxu0 %v1074
    %1129 = vmatprep.subr.mxu0 0.0
    %1130 = vmatpush1.msra.mxu0 %v1073
    %1131 = vmatprep.subr.mxu0 0.0
    %1132 = vmatpush1.msra.mxu0 %v1072
    %1133 = vmatprep.subr.mxu0 0.0
    %1134 = vmatpush1.msra.mxu0 %v1071
    %1135 = vmatprep.subr.mxu0 0.0
    %1136 = vmatpush1.msra.mxu0 %v1070
    %1137 = vmatprep.subr.mxu0 0.0
    %1138 = vmatpush1.msra.mxu0 %v1069
    %1139 = vmatprep.subr.mxu0 0.0
    %1140 = vmatpush1.msra.mxu0 %v1068
    %1141 = vmatprep.subr.mxu0 0.0
    %1142 = vmatpush1.msra.mxu0 %v1067
    %1143 = vmatprep.subr.mxu0 0.0
    %1144 = vmatpush1.msra.mxu0 %v1066
    %1145 = vmatprep.subr.mxu0 0.0
    %1146 = vmatpush1.msra.mxu0 %v1065
    %1147 = vmatprep.subr.mxu0 0.0
    %1148 = vmatpush2.msra.mxu0 %v1096
    %1149 = vmatprep.subr.mxu0 0.0
    %1150 = vmatpush2.msra.mxu0 %v1095
    %1151 = vmatprep.subr.mxu0 0.0
    %1152 = vmatpush2.msra.mxu0 %v1094
    %1153 = vmatprep.subr.mxu0 0.0
    %1154 = vmatpush2.msra.mxu0 %v1093
    %1155 = vmatprep.subr.mxu0 0.0
    %1156 = vmatpush2.msra.mxu0 %v1092
    %1157 = vmatprep.subr.mxu0 0.0
    %1158 = vmatpush2.msra.mxu0 %v1091
    %1159 = vmatprep.subr.mxu0 0.0
    %1160 = vmatpush2.msra.mxu0 %v1090
    %1161 = vmatprep.subr.mxu0 0.0
    %1162 = vmatpush2.msra.mxu0 %v1089
    %1163 = vmatprep.subr.mxu0 0.0
    %1164 = vmatpush2.msra.mxu0 %v1088
    %1165 = vmatprep.subr.mxu0 0.0
    %1166 = vmatpush2.msra.mxu0 %v1087
    %1167 = vmatprep.subr.mxu0 0.0
    %1168 = vmatpush2.msra.mxu0 %v1086
    %1169 = vmatprep.subr.mxu0 0.0
    %1170 = vmatpush2.msra.mxu0 %v1085
    %1171 = vmatprep.subr.mxu0 0.0
    %1172 = vmatpush2.msra.mxu0 %v1084
    %1173 = vmatprep.subr.mxu0 0.0
    %1174 = vmatpush2.msra.mxu0 %v1083
    %1175 = vmatprep.subr.mxu0 0.0
    %1176 = vmatpush2.msra.mxu0 %v1082
    %1177 = vmatprep.subr.mxu0 0.0
    %1178 = vmatpush2.msra.mxu0 %v1081
    %1179 = vmatprep.mubr.f32.mxu0 %v1112
    %1180 = vmatmul.mubr.f32.gmra.mxu0 %v1111
    %v1181 = vpop.f32.mrf.mxu0
    %v1182 = vadd.f32 %v1102, %v1181
    %v1183 = vpop.f32.mrf.mxu0
    %1184 = vdwg.mxu0
    %vm1185 = vcmask 58368
    %1186 = vst.msk [vmem:[#allocation2] sm:$0x3] %vm1185, %v1182
    %v1187 = vlaneseq
    %v1188 = vshrl.u32 %v1187, 7
    %v1189 = vsel %vm1185, %v1182, -inf
    %v1190 = vrot.slane %v1189, 4
    %v1191 = vmax.f32 %v1189, %v1190
    %v1192 = vrot.slane %v1191, 2
    %v1193 = vmax.f32 %v1191, %v1192
    %v1194 = vrot.slane %v1193, 1
    %v1195 = vmax.f32 %v1193, %v1194
    %vm1196 = vcmp.ge.f32.partialorder %v1182, %v1195
    %v1197 = vsel %vm1196, %v1188, 2
    %v1198 = vsel %vm1185, %v1197, 2147483647
    %v1199 = vrot.slane %v1198, 4
    %vm1200 = vcmp.lt.s32.totalorder %v1198, %v1199
    %v1201 = vsel %vm1200, %v1198, %v1199
    %v1202 = vrot.slane %v1201, 2
    %vm1203 = vcmp.lt.s32.totalorder %v1201, %v1202
    %v1204 = vsel %vm1203, %v1201, %v1202
    %v1205 = vrot.slane %v1204, 1
    %vm1206 = vcmp.lt.s32.totalorder %v1204, %v1205
    %v1207 = vsel %vm1206, %v1204, %v1205
    %vm1208 = vcmask 57344
    %1209 = vst.msk [vmem:[#allocation4] sm:$0x1] %vm1208, %v1207
    // Predicated region
    $region22: #{dqn_forward.1} parent=1 // pred_check
      _
    $region23: #{dqn_forward.1} parent=1 // pred_check_branch
      %1211 = sbr.rel (0) target = $region25
    $region24: #{dqn_forward.1} parent=1 // pred_region
      %s1213 = ssub.s32 32, 32
      %1214 = vsyncadd [#allocation3], %s1213
      %s1216 = sshll.u32 [#allocation2], 4
      %s1217 = int_to_ptr.vmem [resolvable:$true] %s1216
      %1219 = dma.vmem_to_hbm [thread:$0]  %s1217, 32, %s5, [#allocation3]
    $region25: #{dqn_forward.1} parent=1 // pred_fallthru
      _
    // Predicated region
    $region26: #{dqn_forward.1} parent=1 // pred_check
      _
    $region27: #{dqn_forward.1} parent=1 // pred_check_branch
      %1221 = sbr.rel (0) target = $region29
    $region28: #{dqn_forward.1} parent=1 // pred_region
      %s1223 = ssub.s32 16, 16
      %1224 = vsyncadd [#allocation5], %s1223
      %s1226 = sshll.u32 [#allocation4], 4
      %s1227 = int_to_ptr.vmem [resolvable:$true] %s1226
      %1229 = dma.vmem_to_hbm [thread:$0]  %s1227, 16, %s6, [#allocation5]
    $region29: #{dqn_forward.1} parent=1 // pred_fallthru
      _
    // Predicated region
    $region30: #{dqn_forward.1} parent=1 // pred_check
      _
    $region31: #{dqn_forward.1} parent=1 // pred_check_branch
      %1231 = sbr.rel (0) target = $region33
    $region32: #{dqn_forward.1} parent=1 // pred_region
      %1232 = dma.done [#allocation3], 32
    $region33: #{dqn_forward.1} parent=1 // pred_fallthru
      _
    // Predicated region
    $region34: #{dqn_forward.1} parent=1 // pred_check
      _
    $region35: #{dqn_forward.1} parent=1 // pred_check_branch
      %1234 = sbr.rel (0) target = $region37
    $region36: #{dqn_forward.1} parent=1 // pred_region
      %1235 = dma.done [#allocation5], 16
    $region37: #{dqn_forward.1} parent=1 // pred_fallthru
      _
    %1236 = vsyncpa [#allocation3], 1
    %1237 = vsyncpa [#allocation5], 1

</llo_original>
